<compile_context>
chip_gen: v6e
topology: v6e:2x2x1
jax: 0.10.0
libtpu: 0.0.40
codegen_flags: <defaults>
</compile_context>

<pallas_src>
import jax
import jax.numpy as jnp
from jax.experimental import pallas as pl
from jax.experimental.pallas import tpu as pltpu

_DEFAULT_BATCH_TILE = 4096  # amortizes grid overhead; ~10-12 MiB peak VMEM at this tile


def _critic_kernel(t_ref,
                   w1_ref, b1_ref,
                   w2_ref, b2_ref,
                   w3_ref, b3_ref,
                   w4_ref, b4_ref,
                   out_ref):
    # t_ref: (TB, 18) f32 -> cast to bf16 on the VPU (removes a wrapper-level HBM pass).
    x = t_ref[...].astype(jnp.bfloat16)

    # Layer 1: Linear(18, 64) + ReLU   (Dropout == identity at inference)
    h1 = jnp.dot(x, w1_ref[...], preferred_element_type=jnp.float32) + b1_ref[...]
    h1 = jnp.maximum(h1, 0.0)

    # Layer 2: Linear(64, 128) + ReLU
    h2 = jnp.dot(h1.astype(jnp.bfloat16), w2_ref[...],
                 preferred_element_type=jnp.float32) + b2_ref[...]
    h2 = jnp.maximum(h2, 0.0)

    # Layer 3: Linear(128, 64) + ReLU
    h3 = jnp.dot(h2.astype(jnp.bfloat16), w3_ref[...],
                 preferred_element_type=jnp.float32) + b3_ref[...]
    h3 = jnp.maximum(h3, 0.0)

    # Layer 4: Linear(64, 1) value head. Contract over the 64 features with the batch
    # landing on lanes ('od,nd->on' => (1, TB)), so the output block is stored with
    # dense 128-lane vsts instead of a masked (TB, 1) column. MXU has plenty of slack.
    v = jnp.einsum('od,nd->on', w4_ref[...], h3.astype(jnp.bfloat16),
                   preferred_element_type=jnp.float32) + b4_ref[...]
    out_ref[...] = v.astype(out_ref.dtype)


def critic_forward(state, params, *, batch_tile=_DEFAULT_BATCH_TILE):
    """Pallas forward. `state` has 'framestack' (unused) and 'telemetry' (B, 18)."""
    telemetry = state["telemetry"]
    B, F = telemetry.shape
    (w1, b1), (w2, b2), (w3, b3), (w4, b4) = params

    # Cast MXU-feeding weights to bf16 once, outside the kernel; keep biases f32.
    w1b = w1.astype(jnp.bfloat16)
    w2b = w2.astype(jnp.bfloat16)
    w3b = w3.astype(jnp.bfloat16)
    w4b = w4.reshape(1, -1).astype(jnp.bfloat16)      # (1, 64) row for the lane-major head
    b1f = b1.reshape(1, -1).astype(jnp.float32)
    b2f = b2.reshape(1, -1).astype(jnp.float32)
    b3f = b3.reshape(1, -1).astype(jnp.float32)
    b4f = b4.reshape(1, 1).astype(jnp.float32)

    t = telemetry if telemetry.dtype == jnp.float32 else telemetry.astype(jnp.float32)

    # Batch tiling: no padding pass; ragged last block reads unspecified tail rows whose
    # (garbage) outputs are discarded by the [:B] slice below.
    tb = int(min(batch_tile, B))
    num_tiles = pl.cdiv(B, tb)

    def resident(shape):
        # Weights/biases: same block every grid step -> stay resident in VMEM.
        return pl.BlockSpec(shape, lambda i: (0, 0))

    in_specs = [
        pl.BlockSpec((tb, F), lambda i: (i, 0)),      # streamed telemetry tiles
        resident(w1b.shape), resident(b1f.shape),
        resident(w2b.shape), resident(b2f.shape),
        resident(w3b.shape), resident(b3f.shape),
        resident(w4b.shape), resident(b4f.shape),
    ]
    # Lane-dense output slab: one (1, tb) row per grid step.
    out_specs = pl.BlockSpec((1, tb), lambda i: (i, 0))

    flops_per_row = 2 * (18 * 64 + 64 * 128 + 128 * 64 + 64 * 1)
    weight_bytes = sum(int(a.size) * a.dtype.itemsize
                       for a in (w1b, b1f, w2b, b2f, w3b, b3f, w4b, b4f))
    cost = pl.CostEstimate(
        flops=int(flops_per_row * B),
        transcendentals=0,
        bytes_accessed=int(B * (F * 4 + 4) + weight_bytes),
    )

    out = pl.pallas_call(
        _critic_kernel,
        out_shape=jax.ShapeDtypeStruct((num_tiles, tb), jnp.float32),
        grid=(num_tiles,),
        in_specs=in_specs,
        out_specs=out_specs,
        compiler_params=pltpu.CompilerParams(
            dimension_semantics=("parallel",),
            vmem_limit_bytes=32 * 1024 * 1024,        # safe on v5e's 16 MiB scoped default
        ),
        cost_estimate=cost,
    )(t, w1b, b1f, w2b, b2f, w3b, b3f, w4b, b4f)

    return out.reshape(-1)[:B].reshape(B, 1)


def init_params(key):
    """Deterministic init matching PyTorch nn.Linear default (uniform +/- 1/sqrt(fan_in)).

    Weights stored transposed: shape (in_features, out_features); biases (1, out_features).
    """
    dims = [(18, 64), (64, 128), (128, 64), (64, 1)]
    params = []
    for i, (fan_in, fan_out) in enumerate(dims):
        kw, kb = jax.random.split(jax.random.fold_in(key, i))
        bound = 1.0 / (fan_in ** 0.5)
        w = jax.random.uniform(kw, (fan_in, fan_out), jnp.float32, -bound, bound)
        b = jax.random.uniform(kb, (1, fan_out), jnp.float32, -bound, bound)
        params.append((w, b))
    return params


def reference_forward(state, params):
    """Plain-JAX reference with the same bf16-input / f32-accumulate precision."""
    x = state["telemetry"].astype(jnp.bfloat16)
    (w1, b1), (w2, b2), (w3, b3), (w4, b4) = params

    def layer(h, w, b):
        y = jnp.dot(h, w.astype(jnp.bfloat16),
                    preferred_element_type=jnp.float32) + b.astype(jnp.float32)
        return jnp.maximum(y, 0.0)

    h = layer(x, w1, b1)
    h = layer(h.astype(jnp.bfloat16), w2, b2)
    h = layer(h.astype(jnp.bfloat16), w3, b3)
    return (jnp.dot(h.astype(jnp.bfloat16), w4.astype(jnp.bfloat16),
                    preferred_element_type=jnp.float32)
            + b4.reshape(1, 1).astype(jnp.float32))


if __name__ == "__main__":
    key = jax.random.PRNGKey(0)
    k_fs, k_tel, k_par = jax.random.split(key, 3)

    # Small, module-consistent shapes: framestack unused, telemetry (B, 18).
    B = 4
    state = {
        "framestack": jax.random.normal(k_fs, (B, 4, 16, 16), jnp.float32),
        "telemetry": jax.random.normal(k_tel, (B, 18), jnp.float32),
    }
    params = init_params(k_par)

    out = jax.block_until_ready(critic_forward(state, params))
    ref = reference_forward(state, params)
    assert out.shape == (B, 1), out.shape
    assert jnp.allclose(out, ref, atol=2e-3, rtol=2e-3), (out, ref)

    # Exercise the multi-tile + ragged-tail path (grid > 1, unpadded last block).
    B2 = 4100
    state2 = {
        "framestack": None,  # unused by forward()
        "telemetry": jax.random.normal(jax.random.fold_in(key, 7), (B2, 18), jnp.float32),
    }
    out2 = jax.block_until_ready(critic_forward(state2, params, batch_tile=1024))
    ref2 = reference_forward(state2, params)
    assert out2.shape == (B2, 1), out2.shape
    assert jnp.allclose(out2, ref2, atol=2e-3, rtol=2e-3)

    print("KERNEL_OK")
</pallas_src>

<mosaic_0001>
module attributes {stable_mosaic.version = 11 : i64} {
  func.func @_critic_kernel(%arg0: i32, %arg1: memref<4x18xf32, #tpu.memory_space<vmem>>, %arg2: memref<18x64xbf16, #tpu.memory_space<vmem>>, %arg3: memref<1x64xf32, #tpu.memory_space<vmem>>, %arg4: memref<64x128xbf16, #tpu.memory_space<vmem>>, %arg5: memref<1x128xf32, #tpu.memory_space<vmem>>, %arg6: memref<128x64xbf16, #tpu.memory_space<vmem>>, %arg7: memref<1x64xf32, #tpu.memory_space<vmem>>, %arg8: memref<1x64xbf16, #tpu.memory_space<vmem>>, %arg9: memref<1x1xf32, #tpu.memory_space<vmem>>, %arg10: memref<1x4xf32, #tpu.memory_space<vmem>>) attributes {dimension_semantics = [#tpu.dimension_semantics<parallel>], iteration_bounds = array<i64: 1>, scalar_prefetch = 0 : i64, scratch_operands = 0 : i64, tpu.core_type = #tpu.core_type<tc>, window_params = [{transform_indices = @transform_0, window_bounds = array<i64: 4, 18>}, {pipeline_mode = #tpu.pipeline_mode<synchronous>, transform_indices = @transform_1, window_bounds = array<i64: 18, 64>}, {pipeline_mode = #tpu.pipeline_mode<synchronous>, transform_indices = @transform_2, window_bounds = array<i64: 1, 64>}, {pipeline_mode = #tpu.pipeline_mode<synchronous>, transform_indices = @transform_3, window_bounds = array<i64: 64, 128>}, {pipeline_mode = #tpu.pipeline_mode<synchronous>, transform_indices = @transform_4, window_bounds = array<i64: 1, 128>}, {pipeline_mode = #tpu.pipeline_mode<synchronous>, transform_indices = @transform_5, window_bounds = array<i64: 128, 64>}, {pipeline_mode = #tpu.pipeline_mode<synchronous>, transform_indices = @transform_6, window_bounds = array<i64: 1, 64>}, {pipeline_mode = #tpu.pipeline_mode<synchronous>, transform_indices = @transform_7, window_bounds = array<i64: 1, 64>}, {pipeline_mode = #tpu.pipeline_mode<synchronous>, transform_indices = @transform_8, window_bounds = array<i64: 1, 1>}, {transform_indices = @transform_9, window_bounds = array<i64: 1, 4>}]} {
    %c0 = arith.constant 0 : index
    %c0_0 = arith.constant 0 : index
    %0 = vector.load %arg1[%c0, %c0_0] : memref<4x18xf32, #tpu.memory_space<vmem>>, vector<4x18xf32>
    %1 = arith.truncf %0 : vector<4x18xf32> to vector<4x18xbf16>
    %c0_1 = arith.constant 0 : index
    %c0_2 = arith.constant 0 : index
    %2 = vector.load %arg2[%c0_1, %c0_2] : memref<18x64xbf16, #tpu.memory_space<vmem>>, vector<18x64xbf16>
    %cst = arith.constant dense<0.000000e+00> : vector<4x64xf32>
    %3 = tpu.matmul %1, %2, %cst {dimension_numbers = #tpu.dot_dimension_numbers<[1], [0], [0], [1], [0, 0, 1, 1], [], []>} : vector<4x18xbf16>, vector<18x64xbf16>, vector<4x64xf32> -> vector<4x64xf32>
    %c0_3 = arith.constant 0 : index
    %c0_4 = arith.constant 0 : index
    %4 = vector.load %arg3[%c0_3, %c0_4] : memref<1x64xf32, #tpu.memory_space<vmem>>, vector<1x64xf32>
    %5 = vector.broadcast %4 : vector<1x64xf32> to vector<4x64xf32>
    %6 = arith.addf %3, %5 : vector<4x64xf32>
    %cst_5 = arith.constant 0.000000e+00 : f32
    %7 = vector.broadcast %cst_5 : f32 to vector<4x64xf32>
    %8 = arith.maximumf %6, %7 : vector<4x64xf32>
    %9 = arith.truncf %8 : vector<4x64xf32> to vector<4x64xbf16>
    %c0_6 = arith.constant 0 : index
    %c0_7 = arith.constant 0 : index
    %10 = vector.load %arg4[%c0_6, %c0_7] : memref<64x128xbf16, #tpu.memory_space<vmem>>, vector<64x128xbf16>
    %cst_8 = arith.constant dense<0.000000e+00> : vector<4x128xf32>
    %11 = tpu.matmul %9, %10, %cst_8 {dimension_numbers = #tpu.dot_dimension_numbers<[1], [0], [0], [1], [0, 0, 1, 1], [], []>} : vector<4x64xbf16>, vector<64x128xbf16>, vector<4x128xf32> -> vector<4x128xf32>
    %c0_9 = arith.constant 0 : index
    %c0_10 = arith.constant 0 : index
    %12 = vector.load %arg5[%c0_9, %c0_10] : memref<1x128xf32, #tpu.memory_space<vmem>>, vector<1x128xf32>
    %13 = vector.broadcast %12 : vector<1x128xf32> to vector<4x128xf32>
    %14 = arith.addf %11, %13 : vector<4x128xf32>
    %cst_11 = arith.constant 0.000000e+00 : f32
    %15 = vector.broadcast %cst_11 : f32 to vector<4x128xf32>
    %16 = arith.maximumf %14, %15 : vector<4x128xf32>
    %17 = arith.truncf %16 : vector<4x128xf32> to vector<4x128xbf16>
    %c0_12 = arith.constant 0 : index
    %c0_13 = arith.constant 0 : index
    %18 = vector.load %arg6[%c0_12, %c0_13] : memref<128x64xbf16, #tpu.memory_space<vmem>>, vector<128x64xbf16>
    %cst_14 = arith.constant dense<0.000000e+00> : vector<4x64xf32>
    %19 = tpu.matmul %17, %18, %cst_14 {dimension_numbers = #tpu.dot_dimension_numbers<[1], [0], [0], [1], [0, 0, 1, 1], [], []>} : vector<4x128xbf16>, vector<128x64xbf16>, vector<4x64xf32> -> vector<4x64xf32>
    %c0_15 = arith.constant 0 : index
    %c0_16 = arith.constant 0 : index
    %20 = vector.load %arg7[%c0_15, %c0_16] : memref<1x64xf32, #tpu.memory_space<vmem>>, vector<1x64xf32>
    %21 = vector.broadcast %20 : vector<1x64xf32> to vector<4x64xf32>
    %22 = arith.addf %19, %21 : vector<4x64xf32>
    %cst_17 = arith.constant 0.000000e+00 : f32
    %23 = vector.broadcast %cst_17 : f32 to vector<4x64xf32>
    %24 = arith.maximumf %22, %23 : vector<4x64xf32>
    %c0_18 = arith.constant 0 : index
    %c0_19 = arith.constant 0 : index
    %25 = vector.load %arg8[%c0_18, %c0_19] : memref<1x64xbf16, #tpu.memory_space<vmem>>, vector<1x64xbf16>
    %26 = arith.truncf %24 : vector<4x64xf32> to vector<4x64xbf16>
    "tpu.trace_start"() <{level = 10 : i32, message = "od,nd->on"}> : () -> ()
    %cst_20 = arith.constant dense<0.000000e+00> : vector<1x4xf32>
    %27 = tpu.matmul %25, %26, %cst_20 {dimension_numbers = #tpu.dot_dimension_numbers<[1], [1], [0], [0], [0, 0, 1, 0], [], []>} : vector<1x64xbf16>, vector<4x64xbf16>, vector<1x4xf32> -> vector<1x4xf32>
    "tpu.trace_stop"() : () -> ()
    %c0_21 = arith.constant 0 : index
    %c0_22 = arith.constant 0 : index
    %28 = vector.load %arg9[%c0_21, %c0_22] : memref<1x1xf32, #tpu.memory_space<vmem>>, vector<1x1xf32>
    %29 = vector.broadcast %28 : vector<1x1xf32> to vector<1x4xf32>
    %30 = arith.addf %27, %29 : vector<1x4xf32>
    %c0_23 = arith.constant 0 : index
    %c0_24 = arith.constant 0 : index
    %31 = vector.load %arg10[%c0_23, %c0_24] : memref<1x4xf32, #tpu.memory_space<vmem>>, vector<1x4xf32>
    tpu.vector_store %arg10[%c0_23, %c0_24], %30 {strides = array<i32>} : memref<1x4xf32, #tpu.memory_space<vmem>>, vector<1x4xf32>,
    return
  }
  func.func @transform_0(%arg0: i32) -> (i32, i32) {
    %c0_i32 = arith.constant 0 : i32
    %c0_i32_0 = arith.constant 0 : i32
    return %arg0, %c0_i32 : i32, i32
  }
  func.func @transform_1(%arg0: i32) -> (i32, i32) {
    %c0_i32 = arith.constant 0 : i32
    %c0_i32_0 = arith.constant 0 : i32
    %c0_i32_1 = arith.constant 0 : i32
    return %c0_i32, %c0_i32_0 : i32, i32
  }
  func.func @transform_2(%arg0: i32) -> (i32, i32) {
    %c0_i32 = arith.constant 0 : i32
    %c0_i32_0 = arith.constant 0 : i32
    %c0_i32_1 = arith.constant 0 : i32
    return %c0_i32, %c0_i32_0 : i32, i32
  }
  func.func @transform_3(%arg0: i32) -> (i32, i32) {
    %c0_i32 = arith.constant 0 : i32
    %c0_i32_0 = arith.constant 0 : i32
    %c0_i32_1 = arith.constant 0 : i32
    return %c0_i32, %c0_i32_0 : i32, i32
  }
  func.func @transform_4(%arg0: i32) -> (i32, i32) {
    %c0_i32 = arith.constant 0 : i32
    %c0_i32_0 = arith.constant 0 : i32
    %c0_i32_1 = arith.constant 0 : i32
    return %c0_i32, %c0_i32_0 : i32, i32
  }
  func.func @transform_5(%arg0: i32) -> (i32, i32) {
    %c0_i32 = arith.constant 0 : i32
    %c0_i32_0 = arith.constant 0 : i32
    %c0_i32_1 = arith.constant 0 : i32
    return %c0_i32, %c0_i32_0 : i32, i32
  }
  func.func @transform_6(%arg0: i32) -> (i32, i32) {
    %c0_i32 = arith.constant 0 : i32
    %c0_i32_0 = arith.constant 0 : i32
    %c0_i32_1 = arith.constant 0 : i32
    return %c0_i32, %c0_i32_0 : i32, i32
  }
  func.func @transform_7(%arg0: i32) -> (i32, i32) {
    %c0_i32 = arith.constant 0 : i32
    %c0_i32_0 = arith.constant 0 : i32
    %c0_i32_1 = arith.constant 0 : i32
    return %c0_i32, %c0_i32_0 : i32, i32
  }
  func.func @transform_8(%arg0: i32) -> (i32, i32) {
    %c0_i32 = arith.constant 0 : i32
    %c0_i32_0 = arith.constant 0 : i32
    %c0_i32_1 = arith.constant 0 : i32
    return %c0_i32, %c0_i32_0 : i32, i32
  }
  func.func @transform_9(%arg0: i32) -> (i32, i32) {
    %c0_i32 = arith.constant 0 : i32
    %c0_i32_0 = arith.constant 0 : i32
    return %arg0, %c0_i32 : i32, i32
  }
}

</mosaic_0001>

<llo_original>
// kernel: tpu_custom_call.1
$region0: #{tpu_custom_call.1}
  #allocation0 [shape = 'u32[]', space=smem, size = 0x4, offset = 0x4, fixed_abs, tag = 'smem constant byte address 0x4 - core index']
  #allocation1 [shape = 'u32[144,128]{1,0:T(1,128)}', space=vmem, size = 0x12000, scoped, tag = 'internal scratch']
  #allocation2 [shape = 'f32[1,1]{1,0:T(1,128)S(1)}', space=vmem, size = 0x200, scoped, tag = 'scoped memory for tpu_custom_call.1']
  %s0 = inlined_call_operand.vmem [shape: f32[4,18], index: 0, kind: input, shape index: {}]
  %s1 = inlined_call_operand.vmem [shape: bf16[18,64], index: 1, kind: input, shape index: {}]
  %s2 = inlined_call_operand.vmem [shape: f32[1,64], index: 2, kind: input, shape index: {}]
  %s3 = inlined_call_operand.vmem [shape: bf16[64,128], index: 3, kind: input, shape index: {}]
  %s4 = inlined_call_operand.vmem [shape: f32[1,128], index: 4, kind: input, shape index: {}]
  %s5 = inlined_call_operand.vmem [shape: bf16[128,64], index: 5, kind: input, shape index: {}]
  %s6 = inlined_call_operand.vmem [shape: f32[1,64], index: 6, kind: input, shape index: {}]
  %s7 = inlined_call_operand.vmem [shape: bf16[1,64], index: 7, kind: input, shape index: {}]
  %s8 = inlined_call_operand.<no memory space> [shape: f32[1,1], index: 8, kind: input, shape index: {}]
  %s9 = inlined_call_operand.hbm [shape: f32[1,4], index: 9, kind: output, shape index: {}]
  %s10 = sld [smem:[#allocation0]]
  $region46: #{tpu_custom_call.1} parent=0
    _
  %s12 = ssub.s32 1, %s10
  %s13 = scalar_select 0, %s12, %s10
  %v14 = vstv %s8
  %15 = vst [vmem:[#allocation2] sm:$0x1] %v14
  $region1: #{tpu_custom_call.1} parent=0
    #allocation3 [shape = 'u8[512]{0}', space=vmem, size = 0x400, scoped, tag = 'output window, operand 0, single buffered']
    #allocation4 [shape = 's32[1]{0}', space=sflag, size = 0x4, scoped, tag = 'scoped memory for tpu_custom_call.1']
    %16 = vsyncpa [#allocation4], 0
    // Predicated region
    $region2: #{tpu_custom_call.1} parent=1 // pred_check
      _
    $region3: #{tpu_custom_call.1} parent=1 // pred_check_branch
      %18 = sbr.rel (0) target = $region5
    $region4: #{tpu_custom_call.1} parent=1 // pred_region
      _
    $region5: #{tpu_custom_call.1} parent=1 // pred_fallthru
      _
    // Predicated region
    $region6: #{tpu_custom_call.1} parent=1 // pred_check
      _
    $region7: #{tpu_custom_call.1} parent=1 // pred_check_branch
      %20 = sbr.rel (0) target = $region9
    $region8: #{tpu_custom_call.1} parent=1 // pred_region
      _
    $region9: #{tpu_custom_call.1} parent=1 // pred_fallthru
      _
    // Predicated region
    $region10: #{tpu_custom_call.1} parent=1 // pred_check
      _
    $region11: #{tpu_custom_call.1} parent=1 // pred_check_branch
      %22 = sbr.rel (0) target = $region13
    $region12: #{tpu_custom_call.1} parent=1 // pred_region
      _
    $region13: #{tpu_custom_call.1} parent=1 // pred_fallthru
      _
    // Predicated region
    $region14: #{tpu_custom_call.1} parent=1 // pred_check
      _
    $region15: #{tpu_custom_call.1} parent=1 // pred_check_branch
      %24 = sbr.rel (0) target = $region17
    $region16: #{tpu_custom_call.1} parent=1 // pred_region
      _
    $region17: #{tpu_custom_call.1} parent=1 // pred_fallthru
      _
    // Predicated region
    $region18: #{tpu_custom_call.1} parent=1 // pred_check
      _
    $region19: #{tpu_custom_call.1} parent=1 // pred_check_branch
      %26 = sbr.rel (0) target = $region21
    $region20: #{tpu_custom_call.1} parent=1 // pred_region
      _
    $region21: #{tpu_custom_call.1} parent=1 // pred_fallthru
      _
    // Predicated region
    $region22: #{tpu_custom_call.1} parent=1 // pred_check
      _
    $region23: #{tpu_custom_call.1} parent=1 // pred_check_branch
      %28 = sbr.rel (0) target = $region25
    $region24: #{tpu_custom_call.1} parent=1 // pred_region
      _
    $region25: #{tpu_custom_call.1} parent=1 // pred_fallthru
      _
    // Predicated region
    $region26: #{tpu_custom_call.1} parent=1 // pred_check
      _
    $region27: #{tpu_custom_call.1} parent=1 // pred_check_branch
      %30 = sbr.rel (0) target = $region29
    $region28: #{tpu_custom_call.1} parent=1 // pred_region
      _
    $region29: #{tpu_custom_call.1} parent=1 // pred_fallthru
      _
    // Predicated region
    $region30: #{tpu_custom_call.1} parent=1 // pred_check
      _
    $region31: #{tpu_custom_call.1} parent=1 // pred_check_branch
      %32 = sbr.rel (0) target = $region33
    $region32: #{tpu_custom_call.1} parent=1 // pred_region
      _
    $region33: #{tpu_custom_call.1} parent=1 // pred_fallthru
      _
    // Predicated region
    $region34: #{tpu_custom_call.1} parent=1 // pred_check
      _
    $region35: #{tpu_custom_call.1} parent=1 // pred_check_branch
      %34 = sbr.rel (0) target = $region37
    $region36: #{tpu_custom_call.1} parent=1 // pred_region
      _
    $region37: #{tpu_custom_call.1} parent=1 // pred_fallthru
      _
    %v36 = vld [vmem:[%s0] sm:$0xf]
    %v37 = vpack.c.bf16 %v36, %v36
    %v38 = vld [vmem:[%s1] sm:$0xf]
    %v39 = vld [vmem:[%s1 + $0x4] sm:$0xf]
    %v40 = vld [vmem:[%s1 + $0x8] sm:$0x1]
    %v41 = vld [vmem:[%s2] sm:$0x1]
    %v43 = vlaneseq
    %v44 = vshrl.u32 %v43, 7
    %v45 = vsub.s32 0, %v44
    %v46 = vrot.slane %v41, %v45
    %v51 = vunpack.c.l.b16 %v38
    %v52 = vunpack.c.l.b16 %v39
    %v53 = vunpack.c.l.b16 %v40
    %v54 = vpack.c.b16 %v52, %v51
    %v55 = vpack.c.b16 %v53, %v53
    %vm57 = vcmask 146432
    %v59 = vsel %vm57, %v37, 0
    %vm61 = vcmask 1040384
    %v63 = vsel %vm61, %v55, 0
    %65 = vmatprep.subr.bf16.mxu0 0
    %66 = vmatpush1.bf16.msra.mxu0 0
    %67 = vmatprep.subr.bf16.mxu0 0
    %68 = vmatpush1.bf16.msra.mxu0 0
    %69 = vmatprep.subr.bf16.mxu0 0
    %70 = vmatpush1.bf16.msra.mxu0 0
    %71 = vmatprep.subr.bf16.mxu0 0
    %72 = vmatpush1.bf16.msra.mxu0 0
    %73 = vmatprep.subr.bf16.mxu0 0
    %74 = vmatpush1.bf16.msra.mxu0 0
    %75 = vmatprep.subr.bf16.mxu0 0
    %76 = vmatpush1.bf16.msra.mxu0 0
    %77 = vmatprep.subr.bf16.mxu0 0
    %78 = vmatpush1.bf16.msra.mxu0 %v63
    %79 = vmatprep.subr.bf16.mxu0 0
    %80 = vmatpush1.bf16.msra.mxu0 %v54
    %81 = vmatprep.subr.bf16.mxu0 0
    %82 = vmatpush2.bf16.msra.mxu0 0
    %83 = vmatprep.subr.bf16.mxu0 0
    %84 = vmatpush2.bf16.msra.mxu0 0
    %85 = vmatprep.subr.bf16.mxu0 0
    %86 = vmatpush2.bf16.msra.mxu0 0
    %87 = vmatprep.subr.bf16.mxu0 0
    %88 = vmatpush2.bf16.msra.mxu0 0
    %89 = vmatprep.subr.bf16.mxu0 0
    %90 = vmatpush2.bf16.msra.mxu0 0
    %91 = vmatprep.subr.bf16.mxu0 0
    %92 = vmatpush2.bf16.msra.mxu0 0
    %93 = vmatprep.subr.bf16.mxu0 0
    %94 = vmatpush2.bf16.msra.mxu0 0
    %95 = vmatprep.subr.bf16.mxu0 0
    %96 = vmatpush2.bf16.msra.mxu0 0
    %97 = vmatprep.mubr.bf16.mxu0 0
    %98 = vmatmul.mubr.bf16.gmra.mxu0 %v59
    %v99 = vpop.f32.mrf.mxu0
    %v100 = vadd.f32 %v46, %v99
    %v101 = vpop.f32.mrf.mxu0
    %v102 = vpop.f32.mrf.mxu0
    %v103 = vpop.f32.mrf.mxu0
    %104 = vdwg.mxu0
    %v105 = vmax.f32 %v100, 0.0
    %v106 = vpack.c.bf16 %v105, %v105
    %v107 = vld [vmem:[%s3] sm:$0xf]
    %v108 = vld [vmem:[%s3 + $0x4] sm:$0xf]
    %v109 = vld [vmem:[%s3 + $0x8] sm:$0xf]
    %v110 = vld [vmem:[%s3 + $0xc] sm:$0xf]
    %v111 = vld [vmem:[%s3 + $0x10] sm:$0xf]
    %v112 = vld [vmem:[%s3 + $0x14] sm:$0xf]
    %v113 = vld [vmem:[%s3 + $0x18] sm:$0xf]
    %v114 = vld [vmem:[%s3 + $0x1c] sm:$0xf]
    %v115 = vld [vmem:[%s4] sm:$0x1]
    %v117 = vlaneseq
    %v118 = vshrl.u32 %v117, 7
    %v119 = vsub.s32 0, %v118
    %v120 = vrot.slane %v115, %v119
    %v130 = vunpack.c.l.b16 %v107
    %v131 = vunpack.c.l.b16 %v108
    %v132 = vunpack.c.l.b16 %v109
    %v133 = vunpack.c.l.b16 %v110
    %v134 = vunpack.c.l.b16 %v111
    %v135 = vunpack.c.l.b16 %v112
    %v136 = vunpack.c.l.b16 %v113
    %v137 = vunpack.c.l.b16 %v114
    %v138 = vpack.c.b16 %v131, %v130
    %v139 = vpack.c.b16 %v133, %v132
    %v140 = vpack.c.b16 %v135, %v134
    %v141 = vpack.c.b16 %v137, %v136
    %vm146 = vcmask 523264
    %v148 = vsel %vm146, %v106, 0
    %150 = vmatprep.subr.bf16.mxu0 0
    %151 = vmatpush1.bf16.msra.mxu0 0
    %152 = vmatprep.subr.bf16.mxu0 0
    %153 = vmatpush1.bf16.msra.mxu0 0
    %154 = vmatprep.subr.bf16.mxu0 0
    %155 = vmatpush1.bf16.msra.mxu0 0
    %156 = vmatprep.subr.bf16.mxu0 0
    %157 = vmatpush1.bf16.msra.mxu0 0
    %158 = vmatprep.subr.bf16.mxu0 0
    %159 = vmatpush1.bf16.msra.mxu0 %v141
    %160 = vmatprep.subr.bf16.mxu0 0
    %161 = vmatpush1.bf16.msra.mxu0 %v140
    %162 = vmatprep.subr.bf16.mxu0 0
    %163 = vmatpush1.bf16.msra.mxu0 %v139
    %164 = vmatprep.subr.bf16.mxu0 0
    %165 = vmatpush1.bf16.msra.mxu0 %v138
    %166 = vmatprep.subr.bf16.mxu0 0
    %167 = vmatpush2.bf16.msra.mxu0 0
    %168 = vmatprep.subr.bf16.mxu0 0
    %169 = vmatpush2.bf16.msra.mxu0 0
    %170 = vmatprep.subr.bf16.mxu0 0
    %171 = vmatpush2.bf16.msra.mxu0 0
    %172 = vmatprep.subr.bf16.mxu0 0
    %173 = vmatpush2.bf16.msra.mxu0 0
    %174 = vmatprep.subr.bf16.mxu0 0
    %175 = vmatpush2.bf16.msra.mxu0 0
    %176 = vmatprep.subr.bf16.mxu0 0
    %177 = vmatpush2.bf16.msra.mxu0 0
    %178 = vmatprep.subr.bf16.mxu0 0
    %179 = vmatpush2.bf16.msra.mxu0 0
    %180 = vmatprep.subr.bf16.mxu0 0
    %181 = vmatpush2.bf16.msra.mxu0 0
    %182 = vmatprep.mubr.bf16.mxu0 0
    %183 = vmatmul.mubr.bf16.gmra.mxu0 %v148
    %v184 = vpop.f32.mrf.mxu0
    %v185 = vadd.f32 %v120, %v184
    %v186 = vpop.f32.mrf.mxu0
    %v187 = vpop.f32.mrf.mxu0
    %v188 = vpop.f32.mrf.mxu0
    %189 = vdwg.mxu0
    %v190 = vmax.f32 %v185, 0.0
    %v191 = vpack.c.bf16 %v190, %v190
    %v192 = vld [vmem:[%s5] sm:$0xf]
    %v193 = vld [vmem:[%s5 + $0x4] sm:$0xf]
    %v194 = vld [vmem:[%s5 + $0x8] sm:$0xf]
    %v195 = vld [vmem:[%s5 + $0xc] sm:$0xf]
    %v196 = vld [vmem:[%s5 + $0x10] sm:$0xf]
    %v197 = vld [vmem:[%s5 + $0x14] sm:$0xf]
    %v198 = vld [vmem:[%s5 + $0x18] sm:$0xf]
    %v199 = vld [vmem:[%s5 + $0x1c] sm:$0xf]
    %v200 = vld [vmem:[%s5 + $0x20] sm:$0xf]
    %v201 = vld [vmem:[%s5 + $0x24] sm:$0xf]
    %v202 = vld [vmem:[%s5 + $0x28] sm:$0xf]
    %v203 = vld [vmem:[%s5 + $0x2c] sm:$0xf]
    %v204 = vld [vmem:[%s5 + $0x30] sm:$0xf]
    %v205 = vld [vmem:[%s5 + $0x34] sm:$0xf]
    %v206 = vld [vmem:[%s5 + $0x38] sm:$0xf]
    %v207 = vld [vmem:[%s5 + $0x3c] sm:$0xf]
    %v208 = vld [vmem:[%s6] sm:$0x1]
    %v210 = vlaneseq
    %v211 = vshrl.u32 %v210, 7
    %v212 = vsub.s32 0, %v211
    %v213 = vrot.slane %v208, %v212
    %v231 = vunpack.c.l.b16 %v192
    %v232 = vunpack.c.l.b16 %v193
    %v233 = vunpack.c.l.b16 %v194
    %v234 = vunpack.c.l.b16 %v195
    %v235 = vunpack.c.l.b16 %v196
    %v236 = vunpack.c.l.b16 %v197
    %v237 = vunpack.c.l.b16 %v198
    %v238 = vunpack.c.l.b16 %v199
    %v239 = vunpack.c.l.b16 %v200
    %v240 = vunpack.c.l.b16 %v201
    %v241 = vunpack.c.l.b16 %v202
    %v242 = vunpack.c.l.b16 %v203
    %v243 = vunpack.c.l.b16 %v204
    %v244 = vunpack.c.l.b16 %v205
    %v245 = vunpack.c.l.b16 %v206
    %v246 = vunpack.c.l.b16 %v207
    %v247 = vpack.c.b16 %v232, %v231
    %v248 = vpack.c.b16 %v234, %v233
    %v249 = vpack.c.b16 %v236, %v235
    %v250 = vpack.c.b16 %v238, %v237
    %v251 = vpack.c.b16 %v240, %v239
    %v252 = vpack.c.b16 %v242, %v241
    %v253 = vpack.c.b16 %v244, %v243
    %v254 = vpack.c.b16 %v246, %v245
    %263 = vmatprep.subr.bf16.mxu0 0
    %264 = vmatpush1.bf16.msra.mxu0 %v254
    %265 = vmatprep.subr.bf16.mxu0 0
    %266 = vmatpush1.bf16.msra.mxu0 %v253
    %267 = vmatprep.subr.bf16.mxu0 0
    %268 = vmatpush1.bf16.msra.mxu0 %v252
    %269 = vmatprep.subr.bf16.mxu0 0
    %270 = vmatpush1.bf16.msra.mxu0 %v251
    %271 = vmatprep.subr.bf16.mxu0 0
    %272 = vmatpush1.bf16.msra.mxu0 %v250
    %273 = vmatprep.subr.bf16.mxu0 0
    %274 = vmatpush1.bf16.msra.mxu0 %v249
    %275 = vmatprep.subr.bf16.mxu0 0
    %276 = vmatpush1.bf16.msra.mxu0 %v248
    %277 = vmatprep.subr.bf16.mxu0 0
    %278 = vmatpush1.bf16.msra.mxu0 %v247
    %279 = vmatprep.subr.bf16.mxu0 0
    %280 = vmatpush2.bf16.msra.mxu0 0
    %281 = vmatprep.subr.bf16.mxu0 0
    %282 = vmatpush2.bf16.msra.mxu0 0
    %283 = vmatprep.subr.bf16.mxu0 0
    %284 = vmatpush2.bf16.msra.mxu0 0
    %285 = vmatprep.subr.bf16.mxu0 0
    %286 = vmatpush2.bf16.msra.mxu0 0
    %287 = vmatprep.subr.bf16.mxu0 0
    %288 = vmatpush2.bf16.msra.mxu0 0
    %289 = vmatprep.subr.bf16.mxu0 0
    %290 = vmatpush2.bf16.msra.mxu0 0
    %291 = vmatprep.subr.bf16.mxu0 0
    %292 = vmatpush2.bf16.msra.mxu0 0
    %293 = vmatprep.subr.bf16.mxu0 0
    %294 = vmatpush2.bf16.msra.mxu0 0
    %295 = vmatprep.mubr.bf16.mxu0 0
    %296 = vmatmul.mubr.bf16.gmra.mxu0 %v191
    %v297 = vpop.f32.mrf.mxu0
    %v298 = vadd.f32 %v213, %v297
    %v299 = vpop.f32.mrf.mxu0
    %v300 = vpop.f32.mrf.mxu0
    %v301 = vpop.f32.mrf.mxu0
    %302 = vdwg.mxu0
    %v303 = vmax.f32 %v298, 0.0
    %v304 = vld [vmem:[%s7] sm:$0x1]
    %v305 = vpack.c.bf16 %v303, %v303
    %v306 = vld [vmem:[#allocation2] sm:$0x1]
    %308 = vset.pattern.permute.xlu0 0
    %309 = vperm.xlu0 %308, %v306
    %v310 = vpop.permute.xlu0 %309
    %v312 = vlaneseq
    %v313 = vshrl.u32 %v312, 7
    %v314 = vsub.s32 0, %v313
    %v315 = vrot.slane %v310, %v314
    %v317 = vsel %vm146, %v304, 0
    %v320 = vsel %vm146, %v305, 0
    %322 = vmatprep.subr.bf16.mxu0 0
    %323 = vmatpush1.bf16.xpose.msra.mxu0 0
    %324 = vmatprep.subr.bf16.mxu0 0
    %325 = vmatpush1.bf16.xpose.msra.mxu0 0
    %326 = vmatprep.subr.bf16.mxu0 0
    %327 = vmatpush1.bf16.xpose.msra.mxu0 0
    %328 = vmatprep.subr.bf16.mxu0 0
    %329 = vmatpush1.bf16.xpose.msra.mxu0 0
    %330 = vmatprep.subr.bf16.mxu0 0
    %331 = vmatpush1.bf16.xpose.msra.mxu0 0
    %332 = vmatprep.subr.bf16.mxu0 0
    %333 = vmatpush1.bf16.xpose.msra.mxu0 0
    %334 = vmatprep.subr.bf16.mxu0 0
    %335 = vmatpush1.bf16.xpose.msra.mxu0 0
    %336 = vmatprep.subr.bf16.mxu0 0
    %337 = vmatpush1.bf16.xpose.msra.mxu0 %v320
    %338 = vmatprep.subr.bf16.mxu0 0
    %339 = vmatpush2.bf16.xpose.msra.mxu0 0
    %340 = vmatprep.subr.bf16.mxu0 0
    %341 = vmatpush2.bf16.xpose.msra.mxu0 0
    %342 = vmatprep.subr.bf16.mxu0 0
    %343 = vmatpush2.bf16.xpose.msra.mxu0 0
    %344 = vmatprep.subr.bf16.mxu0 0
    %345 = vmatpush2.bf16.xpose.msra.mxu0 0
    %346 = vmatprep.subr.bf16.mxu0 0
    %347 = vmatpush2.bf16.xpose.msra.mxu0 0
    %348 = vmatprep.subr.bf16.mxu0 0
    %349 = vmatpush2.bf16.xpose.msra.mxu0 0
    %350 = vmatprep.subr.bf16.mxu0 0
    %351 = vmatpush2.bf16.xpose.msra.mxu0 0
    %352 = vmatprep.subr.bf16.mxu0 0
    %353 = vmatpush2.bf16.xpose.msra.mxu0 0
    %354 = vmatprep.mubr.bf16.mxu0 0
    %355 = vmatmul.mubr.bf16.gmra.mxu0 %v317
    %v356 = vpop.f32.mrf.mxu0
    %v357 = vadd.f32 %v315, %v356
    %v358 = vpop.f32.mrf.mxu0
    %v359 = vpop.f32.mrf.mxu0
    %v360 = vpop.f32.mrf.mxu0
    %361 = vdwg.mxu0
    %vm362 = vcmask 24576
    %363 = vst.msk [vmem:[#allocation3] sm:$0x1] %vm362, %v357
    // Predicated region
    $region38: #{tpu_custom_call.1} parent=1 // pred_check
      _
    $region39: #{tpu_custom_call.1} parent=1 // pred_check_branch
      %365 = sbr.rel (0) target = $region41
    $region40: #{tpu_custom_call.1} parent=1 // pred_region
      %s367 = ssub.s32 16, 16
      %368 = vsyncadd [#allocation4], %s367
      %s370 = sshll.u32 [#allocation3], 4
      %s371 = int_to_ptr.vmem [resolvable:$true] %s370
      %373 = dma.vmem_to_hbm [thread:$0]  %s371, 16, %s9, [#allocation4]
    $region41: #{tpu_custom_call.1} parent=1 // pred_fallthru
      _
    // Predicated region
    $region42: #{tpu_custom_call.1} parent=1 // pred_check
      _
    $region43: #{tpu_custom_call.1} parent=1 // pred_check_branch
      %375 = sbr.rel (0) target = $region45
    $region44: #{tpu_custom_call.1} parent=1 // pred_region
      %376 = dma.done [#allocation4], 16
    $region45: #{tpu_custom_call.1} parent=1 // pred_fallthru
      _
    %377 = vsyncpa [#allocation4], 1

</llo_original>
